<compile_context>
chip_gen: v7x
topology: tpu7x:2x2x1
jax: 0.10.0
libtpu: 0.0.40
codegen_flags: <defaults>
</compile_context>

<pallas_src>
import functools
import math

import jax
import jax.numpy as jnp
from jax.experimental import pallas as pl
from jax.experimental.pallas import tpu as pltpu

EPS = 1e-5
LANE = 128
VROWS_PER_BLOCK = 8   # 5 used rows + 3 zero rows -> each block's group is sublane-aligned


def _round_up(n, m=LANE):
    return ((n + m - 1) // m) * m


def _bn_train(v, gamma, beta):
    """Training-mode BatchNorm1d over the batch axis: one-pass stats fused into
    a single scale/shift.  gamma/beta: (1, C) f32.  The variance is clamped to
    >= 0 so the one-pass form can never feed a negative value to rsqrt."""
    m = jnp.mean(v, axis=0, keepdims=True)
    var = jnp.maximum(jnp.mean(v * v, axis=0, keepdims=True) - m * m, 0.0)
    s = gamma * jax.lax.rsqrt(var + EPS)
    return v * s + (beta - m * s)


def _mlp_fused_kernel(x_ref, vec_ref, w_ref, out_ref, *, blocks_meta):
    """Whole-MLP forward.  All parameters arrive packed in two slabs:

      vec_ref : (8*n_blocks, C_max) f32; rows per block: g1, be1, g2, be2, b_out, 0, 0, 0
      w_ref   : (R_total,    C_max) mxu-dtype; per block: w1 rows, then w2 rows
                [, wp rows immediately after w2 for projection blocks]

    blocks_meta: tuple of (pin, pout, vrow, w1_off, w2_off, use_proj, relu),
    all static Python values, so every slab access below is a static slice.
    """
    x = x_ref[...].astype(jnp.float32)
    for pin, pout, vrow, w1_off, w2_off, use_proj, relu in blocks_meta:
        # --- BN1 + activation (f32 element-wise math) ---
        o = _bn_train(x, vec_ref[vrow:vrow + 1, :pin], vec_ref[vrow + 1:vrow + 2, :pin])
        if relu:
            o = jnp.maximum(o, 0.0)
        # --- Linear 1 (bias dropped: cancelled by BN2's batch-mean subtraction;
        #     training-mode BN only).  Weight sliced from the slab right here.
        w1 = w_ref[w1_off:w1_off + pin, :pout]
        o = jnp.dot(o.astype(w1.dtype), w1, preferred_element_type=jnp.float32)
        # --- BN2 + activation ---
        o = _bn_train(o, vec_ref[vrow + 2:vrow + 3, :pout], vec_ref[vrow + 3:vrow + 4, :pout])
        if relu:
            o = jnp.maximum(o, 0.0)
        b_out = vec_ref[vrow + 4:vrow + 5, :pout]
        if use_proj:
            # Fused Linear-2 + skip projection: [o | x] @ [W2 ; Wp] + (b2 + bp).
            # W2 and Wp occupy contiguous slab rows -> one static slice, K = pout + pin.
            w2wp = w_ref[w2_off:w2_off + pout + pin, :pout]
            ox = jnp.concatenate([o, x], axis=1)
            x = jnp.dot(ox.astype(w2wp.dtype), w2wp, preferred_element_type=jnp.float32) + b_out
        else:
            w2 = w_ref[w2_off:w2_off + pout, :pout]
            x = x + jnp.dot(o.astype(w2.dtype), w2, preferred_element_type=jnp.float32) + b_out
    out_ref[...] = x.astype(out_ref.dtype)


# ---------------------------------------------------------------------------
# Parameter construction (PyTorch-style init) and packing into lane-dense slabs
# ---------------------------------------------------------------------------

def make_block_params(key, cin, cout):
    """Linear: U(-1/sqrt(fan_in), 1/sqrt(fan_in)); BN gamma=1, beta=0.
    Weights stored (in, out) so y = x @ W + b.  Vectors stored (1, C)."""
    k1, k2, k3, k4, k5, k6 = jax.random.split(key, 6)
    bnd1 = 1.0 / math.sqrt(cin)
    bnd2 = 1.0 / math.sqrt(cout)
    p = {
        "w1": jax.random.uniform(k1, (cin, cout), jnp.float32, -bnd1, bnd1),
        "b1": jax.random.uniform(k2, (1, cout), jnp.float32, -bnd1, bnd1),
        "w2": jax.random.uniform(k3, (cout, cout), jnp.float32, -bnd2, bnd2),
        "b2": jax.random.uniform(k4, (1, cout), jnp.float32, -bnd2, bnd2),
        "g1": jnp.ones((1, cin), jnp.float32),
        "be1": jnp.zeros((1, cin), jnp.float32),
        "g2": jnp.ones((1, cout), jnp.float32),
        "be2": jnp.zeros((1, cout), jnp.float32),
    }
    if cin != cout:
        p["wp"] = jax.random.uniform(k5, (cin, cout), jnp.float32, -bnd1, bnd1)
        p["bp"] = jax.random.uniform(k6, (1, cout), jnp.float32, -bnd1, bnd1)
    return p


def make_mlp_params(key, dim_layers):
    keys = jax.random.split(key, len(dim_layers) - 1)
    blocks = []
    for i in range(len(dim_layers) - 2):                          # ReLU blocks
        blocks.append((make_block_params(keys[i], dim_layers[i], dim_layers[i + 1]), True))
    blocks.append((make_block_params(keys[-1], dim_layers[-2], dim_layers[-1]), False))
    return blocks


def _pad2(a, rows, cols):
    return jnp.pad(a, ((0, rows - a.shape[0]), (0, cols - a.shape[1])))


def prepare_padded_mlp(blocks, mxu_dtype=jnp.bfloat16):
    """One-time packing of all parameters into two lane-dense slabs.

    Padded gamma/beta/bias entries are exactly 0 and padded weight rows/cols are
    exactly 0 (also after the bf16 cast), which keeps every padded channel
    identically zero through BN, both Linears and the skip path.
    """
    cmax = 0
    for params, _ in blocks:
        cin, cout = params["w1"].shape
        cmax = max(cmax, _round_up(cin), _round_up(cout))

    vec_rows, w_rows, meta = [], [], []
    w_off, vrow = 0, 0
    for params, relu in blocks:
        cin, cout = params["w1"].shape
        pin, pout = _round_up(cin), _round_up(cout)
        use_proj = "wp" in params
        # Pre-add the skip-projection bias so the fused matmul needs one bias add.
        b_out = params["b2"] + (params["bp"] if use_proj else 0.0)
        vec_rows += [
            _pad2(params["g1"], 1, cmax),
            _pad2(params["be1"], 1, cmax),
            _pad2(params["g2"], 1, cmax),
            _pad2(params["be2"], 1, cmax),
            _pad2(b_out, 1, cmax),
            jnp.zeros((VROWS_PER_BLOCK - 5, cmax), jnp.float32),   # sublane-align next block
        ]
        w1_off = w_off
        w_rows.append(_pad2(params["w1"], pin, cmax)); w_off += pin
        w2_off = w_off
        w_rows.append(_pad2(params["w2"], pout, cmax)); w_off += pout
        if use_proj:
            # wp directly after w2 so [W2 ; Wp] is one contiguous static slice.
            w_rows.append(_pad2(params["wp"], pin, cmax)); w_off += pin
        meta.append((pin, pout, vrow, w1_off, w2_off, use_proj, relu))
        vrow += VROWS_PER_BLOCK

    cin0 = blocks[0][0]["w1"].shape[0]
    cout_final = blocks[-1][0]["w1"].shape[1]
    return {
        "vec_slab": jnp.concatenate(vec_rows, axis=0),                    # f32
        "w_slab": jnp.concatenate(w_rows, axis=0).astype(mxu_dtype),      # bf16 (default) or f32
        "meta": tuple(meta),
        "cin": cin0,
        "cin_padded": _round_up(cin0),
        "cout": cout_final,
        "cout_padded": _round_up(cout_final),
    }


def make_mlp_forward(padded):
    """Builds a jitted forward: pad -> ONE pallas_call -> slice.  The packed
    parameter slabs are closed over as device constants so per-call dispatch
    and the pad/slice glue are amortized/fused by jit."""
    kernel = functools.partial(_mlp_fused_kernel, blocks_meta=padded["meta"])
    vec_slab, w_slab = padded["vec_slab"], padded["w_slab"]
    cin, cinp = padded["cin"], padded["cin_padded"]
    cout, coutp = padded["cout"], padded["cout_padded"]
    vmem = pl.BlockSpec(memory_space=pltpu.MemorySpace.VMEM)

    @jax.jit
    def forward(x):
        batch = x.shape[0]
        xp = jnp.pad(x, ((0, 0), (0, cinp - cin)))
        out_padded = pl.pallas_call(
            kernel,
            out_shape=jax.ShapeDtypeStruct((batch, coutp), jnp.float32),
            in_specs=[vmem, vmem, vmem],
            out_specs=vmem,
        )(xp, vec_slab, w_slab)
        return out_padded[:, :cout]

    return forward


# ---------------------------------------------------------------------------
# Pure-JAX reference (mirrors the PyTorch forward, including the b1 bias)
# ---------------------------------------------------------------------------

def residual_block_ref(x, params, relu):
    def bn(v, g, b):
        m = jnp.mean(v, axis=0, keepdims=True)
        var = jnp.mean((v - m) ** 2, axis=0, keepdims=True)
        return (v - m) / jnp.sqrt(var + EPS) * g + b

    o = bn(x, params["g1"], params["be1"])
    if relu:
        o = jnp.maximum(o, 0.0)
    o = o @ params["w1"] + params["b1"]
    o = bn(o, params["g2"], params["be2"])
    if relu:
        o = jnp.maximum(o, 0.0)
    o = o @ params["w2"] + params["b2"]
    skip = x @ params["wp"] + params["bp"] if "wp" in params else x
    return skip + o


def mlp_forward_ref(x, blocks):
    for params, relu in blocks:
        x = residual_block_ref(x, params, relu)
    return x


if __name__ == "__main__":
    key = jax.random.PRNGKey(0)
    k_x, k_p = jax.random.split(key)

    dim_layers = [16, 32, 32, 8]   # MLP([16, 32, 32, 8]) -> 3 ResidualBlocks
    batch = 8                      # x: (batch, in_channel)  (2-D input path)

    x = jax.random.normal(k_x, (batch, dim_layers[0]), jnp.float32)
    blocks = make_mlp_params(k_p, dim_layers)

    ref = jax.block_until_ready(mlp_forward_ref(x, blocks))

    # --- f32 matmul path: tight exact-semantics check against the reference ---
    fwd_f32 = make_mlp_forward(prepare_padded_mlp(blocks, mxu_dtype=jnp.float32))
    out_f32 = jax.block_until_ready(fwd_f32(x))
    assert out_f32.shape == (batch, dim_layers[-1]), out_f32.shape
    err_f32 = float(jnp.max(jnp.abs(out_f32 - ref)))
    assert jnp.allclose(out_f32, ref, rtol=1e-3, atol=1e-3), err_f32

    # --- bf16-operand path (default; MXU-native on v6e/v7x, halves weight DMA bytes).
    #     bf16 has an 8-bit mantissa, so agreement with the f32 reference is at the
    #     ~1e-2 level across 3 residual blocks -> looser tolerance here.
    fwd_bf16 = make_mlp_forward(prepare_padded_mlp(blocks, mxu_dtype=jnp.bfloat16))
    out_bf16 = jax.block_until_ready(fwd_bf16(x))
    assert out_bf16.shape == (batch, dim_layers[-1]), out_bf16.shape
    err_bf16 = float(jnp.max(jnp.abs(out_bf16 - ref)))
    assert jnp.allclose(out_bf16, ref, rtol=5e-2, atol=5e-2), err_bf16

    print("KERNEL_OK")
</pallas_src>

<mosaic_0001>
module attributes {stable_mosaic.version = 11 : i64} {
  func.func @_mlp_fused_kernel(%arg0: memref<8x128xf32, #tpu.memory_space<vmem>>, %arg1: memref<24x128xf32, #tpu.memory_space<vmem>>, %arg2: memref<1024x128xf32, #tpu.memory_space<vmem>>, %arg3: memref<8x128xf32, #tpu.memory_space<vmem>>) attributes {dimension_semantics = [], scalar_prefetch = 0 : i64, scratch_operands = 0 : i64, tpu.core_type = #tpu.core_type<tc>} {
    %c0 = arith.constant 0 : index
    %c0_0 = arith.constant 0 : index
    %0 = vector.load %arg0[%c0, %c0_0] : memref<8x128xf32, #tpu.memory_space<vmem>>, vector<8x128xf32>
    %c0_1 = arith.constant 0 : index
    %c0_2 = arith.constant 0 : index
    %1 = vector.load %arg1[%c0_1, %c0_2] : memref<24x128xf32, #tpu.memory_space<vmem>>, vector<1x128xf32>
    %c1 = arith.constant 1 : index
    %c0_3 = arith.constant 0 : index
    %2 = vector.load %arg1[%c1, %c0_3] : memref<24x128xf32, #tpu.memory_space<vmem>>, vector<1x128xf32>
    %cst = arith.constant dense<0.000000e+00> : vector<128xf32>
    %3 = vector.multi_reduction <add>, %0, %cst [0] : vector<8x128xf32> to vector<128xf32>
    %4 = vector.shape_cast %3 : vector<128xf32> to vector<1x128xf32>
    %cst_4 = arith.constant 8.000000e+00 : f32
    %5 = vector.broadcast %cst_4 : f32 to vector<1x128xf32>
    %6 = arith.divf %4, %5 : vector<1x128xf32>
    %7 = arith.mulf %0, %0 : vector<8x128xf32>
    %cst_5 = arith.constant dense<0.000000e+00> : vector<128xf32>
    %8 = vector.multi_reduction <add>, %7, %cst_5 [0] : vector<8x128xf32> to vector<128xf32>
    %9 = vector.shape_cast %8 : vector<128xf32> to vector<1x128xf32>
    %cst_6 = arith.constant 8.000000e+00 : f32
    %10 = vector.broadcast %cst_6 : f32 to vector<1x128xf32>
    %11 = arith.divf %9, %10 : vector<1x128xf32>
    %12 = arith.mulf %6, %6 : vector<1x128xf32>
    %13 = arith.subf %11, %12 : vector<1x128xf32>
    %cst_7 = arith.constant 0.000000e+00 : f32
    %14 = vector.broadcast %cst_7 : f32 to vector<1x128xf32>
    %15 = arith.maximumf %13, %14 : vector<1x128xf32>
    %cst_8 = arith.constant 9.99999974E-6 : f32
    %16 = vector.broadcast %cst_8 : f32 to vector<1x128xf32>
    %17 = arith.addf %15, %16 : vector<1x128xf32>
    %18 = math.rsqrt %17 : vector<1x128xf32>
    %19 = arith.mulf %1, %18 : vector<1x128xf32>
    %20 = vector.broadcast %19 : vector<1x128xf32> to vector<8x128xf32>
    %21 = arith.mulf %0, %20 : vector<8x128xf32>
    %22 = arith.mulf %6, %19 : vector<1x128xf32>
    %23 = arith.subf %2, %22 : vector<1x128xf32>
    %24 = vector.broadcast %23 : vector<1x128xf32> to vector<8x128xf32>
    %25 = arith.addf %21, %24 : vector<8x128xf32>
    %cst_9 = arith.constant 0.000000e+00 : f32
    %26 = vector.broadcast %cst_9 : f32 to vector<8x128xf32>
    %27 = arith.maximumf %25, %26 : vector<8x128xf32>
    %c0_10 = arith.constant 0 : index
    %c0_11 = arith.constant 0 : index
    %28 = vector.load %arg2[%c0_10, %c0_11] : memref<1024x128xf32, #tpu.memory_space<vmem>>, vector<128x128xf32>
    %cst_12 = arith.constant dense<0.000000e+00> : vector<8x128xf32>
    %29 = tpu.matmul %27, %28, %cst_12 {dimension_numbers = #tpu.dot_dimension_numbers<[1], [0], [0], [1], [0, 0, 1, 1], [], []>} : vector<8x128xf32>, vector<128x128xf32>, vector<8x128xf32> -> vector<8x128xf32>
    %c2 = arith.constant 2 : index
    %c0_13 = arith.constant 0 : index
    %30 = vector.load %arg1[%c2, %c0_13] : memref<24x128xf32, #tpu.memory_space<vmem>>, vector<1x128xf32>
    %c3 = arith.constant 3 : index
    %c0_14 = arith.constant 0 : index
    %31 = vector.load %arg1[%c3, %c0_14] : memref<24x128xf32, #tpu.memory_space<vmem>>, vector<1x128xf32>
    %cst_15 = arith.constant dense<0.000000e+00> : vector<128xf32>
    %32 = vector.multi_reduction <add>, %29, %cst_15 [0] : vector<8x128xf32> to vector<128xf32>
    %33 = vector.shape_cast %32 : vector<128xf32> to vector<1x128xf32>
    %cst_16 = arith.constant 8.000000e+00 : f32
    %34 = vector.broadcast %cst_16 : f32 to vector<1x128xf32>
    %35 = arith.divf %33, %34 : vector<1x128xf32>
    %36 = arith.mulf %29, %29 : vector<8x128xf32>
    %cst_17 = arith.constant dense<0.000000e+00> : vector<128xf32>
    %37 = vector.multi_reduction <add>, %36, %cst_17 [0] : vector<8x128xf32> to vector<128xf32>
    %38 = vector.shape_cast %37 : vector<128xf32> to vector<1x128xf32>
    %cst_18 = arith.constant 8.000000e+00 : f32
    %39 = vector.broadcast %cst_18 : f32 to vector<1x128xf32>
    %40 = arith.divf %38, %39 : vector<1x128xf32>
    %41 = arith.mulf %35, %35 : vector<1x128xf32>
    %42 = arith.subf %40, %41 : vector<1x128xf32>
    %cst_19 = arith.constant 0.000000e+00 : f32
    %43 = vector.broadcast %cst_19 : f32 to vector<1x128xf32>
    %44 = arith.maximumf %42, %43 : vector<1x128xf32>
    %cst_20 = arith.constant 9.99999974E-6 : f32
    %45 = vector.broadcast %cst_20 : f32 to vector<1x128xf32>
    %46 = arith.addf %44, %45 : vector<1x128xf32>
    %47 = math.rsqrt %46 : vector<1x128xf32>
    %48 = arith.mulf %30, %47 : vector<1x128xf32>
    %49 = vector.broadcast %48 : vector<1x128xf32> to vector<8x128xf32>
    %50 = arith.mulf %29, %49 : vector<8x128xf32>
    %51 = arith.mulf %35, %48 : vector<1x128xf32>
    %52 = arith.subf %31, %51 : vector<1x128xf32>
    %53 = vector.broadcast %52 : vector<1x128xf32> to vector<8x128xf32>
    %54 = arith.addf %50, %53 : vector<8x128xf32>
    %cst_21 = arith.constant 0.000000e+00 : f32
    %55 = vector.broadcast %cst_21 : f32 to vector<8x128xf32>
    %56 = arith.maximumf %54, %55 : vector<8x128xf32>
    %c4 = arith.constant 4 : index
    %c0_22 = arith.constant 0 : index
    %57 = vector.load %arg1[%c4, %c0_22] : memref<24x128xf32, #tpu.memory_space<vmem>>, vector<1x128xf32>
    %c128 = arith.constant 128 : index
    %c0_23 = arith.constant 0 : index
    %58 = vector.load %arg2[%c128, %c0_23] : memref<1024x128xf32, #tpu.memory_space<vmem>>, vector<256x128xf32>
    %59 = tpu.concatenate %56, %0 in 1 : vector<8x128xf32>, vector<8x128xf32> -> vector<8x256xf32>
    %cst_24 = arith.constant dense<0.000000e+00> : vector<8x128xf32>
    %60 = tpu.matmul %59, %58, %cst_24 {dimension_numbers = #tpu.dot_dimension_numbers<[1], [0], [0], [1], [0, 0, 1, 1], [], []>} : vector<8x256xf32>, vector<256x128xf32>, vector<8x128xf32> -> vector<8x128xf32>
    %61 = vector.broadcast %57 : vector<1x128xf32> to vector<8x128xf32>
    %62 = arith.addf %60, %61 : vector<8x128xf32>
    %c8 = arith.constant 8 : index
    %c0_25 = arith.constant 0 : index
    %63 = vector.load %arg1[%c8, %c0_25] : memref<24x128xf32, #tpu.memory_space<vmem>>, vector<1x128xf32>
    %c9 = arith.constant 9 : index
    %c0_26 = arith.constant 0 : index
    %64 = vector.load %arg1[%c9, %c0_26] : memref<24x128xf32, #tpu.memory_space<vmem>>, vector<1x128xf32>
    %cst_27 = arith.constant dense<0.000000e+00> : vector<128xf32>
    %65 = vector.multi_reduction <add>, %62, %cst_27 [0] : vector<8x128xf32> to vector<128xf32>
    %66 = vector.shape_cast %65 : vector<128xf32> to vector<1x128xf32>
    %cst_28 = arith.constant 8.000000e+00 : f32
    %67 = vector.broadcast %cst_28 : f32 to vector<1x128xf32>
    %68 = arith.divf %66, %67 : vector<1x128xf32>
    %69 = arith.mulf %62, %62 : vector<8x128xf32>
    %cst_29 = arith.constant dense<0.000000e+00> : vector<128xf32>
    %70 = vector.multi_reduction <add>, %69, %cst_29 [0] : vector<8x128xf32> to vector<128xf32>
    %71 = vector.shape_cast %70 : vector<128xf32> to vector<1x128xf32>
    %cst_30 = arith.constant 8.000000e+00 : f32
    %72 = vector.broadcast %cst_30 : f32 to vector<1x128xf32>
    %73 = arith.divf %71, %72 : vector<1x128xf32>
    %74 = arith.mulf %68, %68 : vector<1x128xf32>
    %75 = arith.subf %73, %74 : vector<1x128xf32>
    %cst_31 = arith.constant 0.000000e+00 : f32
    %76 = vector.broadcast %cst_31 : f32 to vector<1x128xf32>
    %77 = arith.maximumf %75, %76 : vector<1x128xf32>
    %cst_32 = arith.constant 9.99999974E-6 : f32
    %78 = vector.broadcast %cst_32 : f32 to vector<1x128xf32>
    %79 = arith.addf %77, %78 : vector<1x128xf32>
    %80 = math.rsqrt %79 : vector<1x128xf32>
    %81 = arith.mulf %63, %80 : vector<1x128xf32>
    %82 = vector.broadcast %81 : vector<1x128xf32> to vector<8x128xf32>
    %83 = arith.mulf %62, %82 : vector<8x128xf32>
    %84 = arith.mulf %68, %81 : vector<1x128xf32>
    %85 = arith.subf %64, %84 : vector<1x128xf32>
    %86 = vector.broadcast %85 : vector<1x128xf32> to vector<8x128xf32>
    %87 = arith.addf %83, %86 : vector<8x128xf32>
    %cst_33 = arith.constant 0.000000e+00 : f32
    %88 = vector.broadcast %cst_33 : f32 to vector<8x128xf32>
    %89 = arith.maximumf %87, %88 : vector<8x128xf32>
    %c384 = arith.constant 384 : index
    %c0_34 = arith.constant 0 : index
    %90 = vector.load %arg2[%c384, %c0_34] : memref<1024x128xf32, #tpu.memory_space<vmem>>, vector<128x128xf32>
    %cst_35 = arith.constant dense<0.000000e+00> : vector<8x128xf32>
    %91 = tpu.matmul %89, %90, %cst_35 {dimension_numbers = #tpu.dot_dimension_numbers<[1], [0], [0], [1], [0, 0, 1, 1], [], []>} : vector<8x128xf32>, vector<128x128xf32>, vector<8x128xf32> -> vector<8x128xf32>
    %c10 = arith.constant 10 : index
    %c0_36 = arith.constant 0 : index
    %92 = vector.load %arg1[%c10, %c0_36] : memref<24x128xf32, #tpu.memory_space<vmem>>, vector<1x128xf32>
    %c11 = arith.constant 11 : index
    %c0_37 = arith.constant 0 : index
    %93 = vector.load %arg1[%c11, %c0_37] : memref<24x128xf32, #tpu.memory_space<vmem>>, vector<1x128xf32>
    %cst_38 = arith.constant dense<0.000000e+00> : vector<128xf32>
    %94 = vector.multi_reduction <add>, %91, %cst_38 [0] : vector<8x128xf32> to vector<128xf32>
    %95 = vector.shape_cast %94 : vector<128xf32> to vector<1x128xf32>
    %cst_39 = arith.constant 8.000000e+00 : f32
    %96 = vector.broadcast %cst_39 : f32 to vector<1x128xf32>
    %97 = arith.divf %95, %96 : vector<1x128xf32>
    %98 = arith.mulf %91, %91 : vector<8x128xf32>
    %cst_40 = arith.constant dense<0.000000e+00> : vector<128xf32>
    %99 = vector.multi_reduction <add>, %98, %cst_40 [0] : vector<8x128xf32> to vector<128xf32>
    %100 = vector.shape_cast %99 : vector<128xf32> to vector<1x128xf32>
    %cst_41 = arith.constant 8.000000e+00 : f32
    %101 = vector.broadcast %cst_41 : f32 to vector<1x128xf32>
    %102 = arith.divf %100, %101 : vector<1x128xf32>
    %103 = arith.mulf %97, %97 : vector<1x128xf32>
    %104 = arith.subf %102, %103 : vector<1x128xf32>
    %cst_42 = arith.constant 0.000000e+00 : f32
    %105 = vector.broadcast %cst_42 : f32 to vector<1x128xf32>
    %106 = arith.maximumf %104, %105 : vector<1x128xf32>
    %cst_43 = arith.constant 9.99999974E-6 : f32
    %107 = vector.broadcast %cst_43 : f32 to vector<1x128xf32>
    %108 = arith.addf %106, %107 : vector<1x128xf32>
    %109 = math.rsqrt %108 : vector<1x128xf32>
    %110 = arith.mulf %92, %109 : vector<1x128xf32>
    %111 = vector.broadcast %110 : vector<1x128xf32> to vector<8x128xf32>
    %112 = arith.mulf %91, %111 : vector<8x128xf32>
    %113 = arith.mulf %97, %110 : vector<1x128xf32>
    %114 = arith.subf %93, %113 : vector<1x128xf32>
    %115 = vector.broadcast %114 : vector<1x128xf32> to vector<8x128xf32>
    %116 = arith.addf %112, %115 : vector<8x128xf32>
    %cst_44 = arith.constant 0.000000e+00 : f32
    %117 = vector.broadcast %cst_44 : f32 to vector<8x128xf32>
    %118 = arith.maximumf %116, %117 : vector<8x128xf32>
    %c12 = arith.constant 12 : index
    %c0_45 = arith.constant 0 : index
    %119 = vector.load %arg1[%c12, %c0_45] : memref<24x128xf32, #tpu.memory_space<vmem>>, vector<1x128xf32>
    %c512 = arith.constant 512 : index
    %c0_46 = arith.constant 0 : index
    %120 = vector.load %arg2[%c512, %c0_46] : memref<1024x128xf32, #tpu.memory_space<vmem>>, vector<128x128xf32>
    %cst_47 = arith.constant dense<0.000000e+00> : vector<8x128xf32>
    %121 = tpu.matmul %118, %120, %cst_47 {dimension_numbers = #tpu.dot_dimension_numbers<[1], [0], [0], [1], [0, 0, 1, 1], [], []>} : vector<8x128xf32>, vector<128x128xf32>, vector<8x128xf32> -> vector<8x128xf32>
    %122 = arith.addf %62, %121 : vector<8x128xf32>
    %123 = vector.broadcast %119 : vector<1x128xf32> to vector<8x128xf32>
    %124 = arith.addf %122, %123 : vector<8x128xf32>
    %c16 = arith.constant 16 : index
    %c0_48 = arith.constant 0 : index
    %125 = vector.load %arg1[%c16, %c0_48] : memref<24x128xf32, #tpu.memory_space<vmem>>, vector<1x128xf32>
    %c17 = arith.constant 17 : index
    %c0_49 = arith.constant 0 : index
    %126 = vector.load %arg1[%c17, %c0_49] : memref<24x128xf32, #tpu.memory_space<vmem>>, vector<1x128xf32>
    %cst_50 = arith.constant dense<0.000000e+00> : vector<128xf32>
    %127 = vector.multi_reduction <add>, %124, %cst_50 [0] : vector<8x128xf32> to vector<128xf32>
    %128 = vector.shape_cast %127 : vector<128xf32> to vector<1x128xf32>
    %cst_51 = arith.constant 8.000000e+00 : f32
    %129 = vector.broadcast %cst_51 : f32 to vector<1x128xf32>
    %130 = arith.divf %128, %129 : vector<1x128xf32>
    %131 = arith.mulf %124, %124 : vector<8x128xf32>
    %cst_52 = arith.constant dense<0.000000e+00> : vector<128xf32>
    %132 = vector.multi_reduction <add>, %131, %cst_52 [0] : vector<8x128xf32> to vector<128xf32>
    %133 = vector.shape_cast %132 : vector<128xf32> to vector<1x128xf32>
    %cst_53 = arith.constant 8.000000e+00 : f32
    %134 = vector.broadcast %cst_53 : f32 to vector<1x128xf32>
    %135 = arith.divf %133, %134 : vector<1x128xf32>
    %136 = arith.mulf %130, %130 : vector<1x128xf32>
    %137 = arith.subf %135, %136 : vector<1x128xf32>
    %cst_54 = arith.constant 0.000000e+00 : f32
    %138 = vector.broadcast %cst_54 : f32 to vector<1x128xf32>
    %139 = arith.maximumf %137, %138 : vector<1x128xf32>
    %cst_55 = arith.constant 9.99999974E-6 : f32
    %140 = vector.broadcast %cst_55 : f32 to vector<1x128xf32>
    %141 = arith.addf %139, %140 : vector<1x128xf32>
    %142 = math.rsqrt %141 : vector<1x128xf32>
    %143 = arith.mulf %125, %142 : vector<1x128xf32>
    %144 = vector.broadcast %143 : vector<1x128xf32> to vector<8x128xf32>
    %145 = arith.mulf %124, %144 : vector<8x128xf32>
    %146 = arith.mulf %130, %143 : vector<1x128xf32>
    %147 = arith.subf %126, %146 : vector<1x128xf32>
    %148 = vector.broadcast %147 : vector<1x128xf32> to vector<8x128xf32>
    %149 = arith.addf %145, %148 : vector<8x128xf32>
    %c640 = arith.constant 640 : index
    %c0_56 = arith.constant 0 : index
    %150 = vector.load %arg2[%c640, %c0_56] : memref<1024x128xf32, #tpu.memory_space<vmem>>, vector<128x128xf32>
    %cst_57 = arith.constant dense<0.000000e+00> : vector<8x128xf32>
    %151 = tpu.matmul %149, %150, %cst_57 {dimension_numbers = #tpu.dot_dimension_numbers<[1], [0], [0], [1], [0, 0, 1, 1], [], []>} : vector<8x128xf32>, vector<128x128xf32>, vector<8x128xf32> -> vector<8x128xf32>
    %c18 = arith.constant 18 : index
    %c0_58 = arith.constant 0 : index
    %152 = vector.load %arg1[%c18, %c0_58] : memref<24x128xf32, #tpu.memory_space<vmem>>, vector<1x128xf32>
    %c19 = arith.constant 19 : index
    %c0_59 = arith.constant 0 : index
    %153 = vector.load %arg1[%c19, %c0_59] : memref<24x128xf32, #tpu.memory_space<vmem>>, vector<1x128xf32>
    %cst_60 = arith.constant dense<0.000000e+00> : vector<128xf32>
    %154 = vector.multi_reduction <add>, %151, %cst_60 [0] : vector<8x128xf32> to vector<128xf32>
    %155 = vector.shape_cast %154 : vector<128xf32> to vector<1x128xf32>
    %cst_61 = arith.constant 8.000000e+00 : f32
    %156 = vector.broadcast %cst_61 : f32 to vector<1x128xf32>
    %157 = arith.divf %155, %156 : vector<1x128xf32>
    %158 = arith.mulf %151, %151 : vector<8x128xf32>
    %cst_62 = arith.constant dense<0.000000e+00> : vector<128xf32>
    %159 = vector.multi_reduction <add>, %158, %cst_62 [0] : vector<8x128xf32> to vector<128xf32>
    %160 = vector.shape_cast %159 : vector<128xf32> to vector<1x128xf32>
    %cst_63 = arith.constant 8.000000e+00 : f32
    %161 = vector.broadcast %cst_63 : f32 to vector<1x128xf32>
    %162 = arith.divf %160, %161 : vector<1x128xf32>
    %163 = arith.mulf %157, %157 : vector<1x128xf32>
    %164 = arith.subf %162, %163 : vector<1x128xf32>
    %cst_64 = arith.constant 0.000000e+00 : f32
    %165 = vector.broadcast %cst_64 : f32 to vector<1x128xf32>
    %166 = arith.maximumf %164, %165 : vector<1x128xf32>
    %cst_65 = arith.constant 9.99999974E-6 : f32
    %167 = vector.broadcast %cst_65 : f32 to vector<1x128xf32>
    %168 = arith.addf %166, %167 : vector<1x128xf32>
    %169 = math.rsqrt %168 : vector<1x128xf32>
    %170 = arith.mulf %152, %169 : vector<1x128xf32>
    %171 = vector.broadcast %170 : vector<1x128xf32> to vector<8x128xf32>
    %172 = arith.mulf %151, %171 : vector<8x128xf32>
    %173 = arith.mulf %157, %170 : vector<1x128xf32>
    %174 = arith.subf %153, %173 : vector<1x128xf32>
    %175 = vector.broadcast %174 : vector<1x128xf32> to vector<8x128xf32>
    %176 = arith.addf %172, %175 : vector<8x128xf32>
    %c20 = arith.constant 20 : index
    %c0_66 = arith.constant 0 : index
    %177 = vector.load %arg1[%c20, %c0_66] : memref<24x128xf32, #tpu.memory_space<vmem>>, vector<1x128xf32>
    %c768 = arith.constant 768 : index
    %c0_67 = arith.constant 0 : index
    %178 = vector.load %arg2[%c768, %c0_67] : memref<1024x128xf32, #tpu.memory_space<vmem>>, vector<256x128xf32>
    %179 = tpu.concatenate %176, %124 in 1 : vector<8x128xf32>, vector<8x128xf32> -> vector<8x256xf32>
    %cst_68 = arith.constant dense<0.000000e+00> : vector<8x128xf32>
    %180 = tpu.matmul %179, %178, %cst_68 {dimension_numbers = #tpu.dot_dimension_numbers<[1], [0], [0], [1], [0, 0, 1, 1], [], []>} : vector<8x256xf32>, vector<256x128xf32>, vector<8x128xf32> -> vector<8x128xf32>
    %181 = vector.broadcast %177 : vector<1x128xf32> to vector<8x128xf32>
    %182 = arith.addf %180, %181 : vector<8x128xf32>
    %c0_69 = arith.constant 0 : index
    %c0_70 = arith.constant 0 : index
    %183 = vector.load %arg3[%c0_69, %c0_70] : memref<8x128xf32, #tpu.memory_space<vmem>>, vector<8x128xf32>
    tpu.vector_store %arg3[%c0_69, %c0_70], %182 {strides = array<i32>} : memref<8x128xf32, #tpu.memory_space<vmem>>, vector<8x128xf32>,
    return
  }
}

</mosaic_0001>

<llo_original>
// kernel: forward.1
$region0: #{forward.1}
  #allocation0 [shape = 'u32[]', space=smem, size = 0x4, offset = 0x4, fixed_abs, tag = 'smem constant byte address 0x4 - core index']
  #allocation1 [shape = 'u32[144,128]{1,0:T(1,128)}', space=vmem, size = 0x12000, scoped, tag = 'internal scratch']
  %s0 = inlined_call_operand.vmem [shape: f32[8,128], index: 0, kind: input, shape index: {}]
  %s1 = inlined_call_operand.hbm [shape: f32[24,128], index: 1, kind: input, shape index: {}]
  %s2 = inlined_call_operand.hbm [shape: f32[1024,128], index: 2, kind: input, shape index: {}]
  %s3 = inlined_call_operand.hbm [shape: f32[8,128], index: 3, kind: output, shape index: {}]
  %s4 = sld [smem:[#allocation0]]
  $region30: #{forward.1} parent=0
    _
  %s6 = ssub.s32 1, %s4
  %s7 = scalar_select 0, %s6, %s4
  $region1: #{forward.1} parent=0
    #allocation2 [shape = 'u8[12288]{0}', space=vmem, size = 0x3000, scoped, tag = 'input window, operand 1, single buffered']
    #allocation3 [shape = 's32[1]{0}', space=sflag, size = 0x4, scoped, tag = 'scoped memory for forward.1']
    #allocation4 [shape = 's32[1]{0}', space=sflag, size = 0x4, scoped, tag = 'scoped memory for forward.1']
    #allocation5 [shape = 'u8[524288]{0}', space=vmem, size = 0x80000, scoped, tag = 'input window, operand 2, single buffered']
    #allocation6 [shape = 's32[1]{0}', space=sflag, size = 0x4, scoped, tag = 'scoped memory for forward.1']
    #allocation7 [shape = 'u8[4096]{0}', space=vmem, size = 0x1000, scoped, tag = 'output window, operand 0, single buffered']
    %8 = vsyncpa [#allocation3], 0
    %9 = vsyncpa [#allocation6], 0
    %10 = vsyncpa [#allocation4], 0
    // Predicated region
    $region2: #{forward.1} parent=1 // pred_check
      _
    $region3: #{forward.1} parent=1 // pred_check_branch
      %12 = sbr.rel (0) target = $region5
    $region4: #{forward.1} parent=1 // pred_region
      _
    $region5: #{forward.1} parent=1 // pred_fallthru
      _
    // Predicated region
    $region6: #{forward.1} parent=1 // pred_check
      _
    $region7: #{forward.1} parent=1 // pred_check_branch
      %14 = sbr.rel (0) target = $region9
    $region8: #{forward.1} parent=1 // pred_region
      %s16 = ssub.s32 384, 384
      %17 = vsyncadd [#allocation3], %s16
      %s18 = sshll.u32 [#allocation2], 4
      %s19 = int_to_ptr.vmem [resolvable:$true] %s18
      %24 = dma.hbm_to_vmem [thread:$0]  %s1, 384, %s19, [#allocation3], 128, 128, 8
    $region9: #{forward.1} parent=1 // pred_fallthru
      _
    // Predicated region
    $region10: #{forward.1} parent=1 // pred_check
      _
    $region11: #{forward.1} parent=1 // pred_check_branch
      %26 = sbr.rel (0) target = $region13
    $region12: #{forward.1} parent=1 // pred_region
      %s28 = ssub.s32 16384, 16384
      %29 = vsyncadd [#allocation6], %s28
      %s30 = sshll.u32 [#allocation5], 4
      %s31 = int_to_ptr.vmem [resolvable:$true] %s30
      %36 = dma.hbm_to_vmem [thread:$0]  %s2, 16384, %s31, [#allocation6], 128, 128, 8
    $region13: #{forward.1} parent=1 // pred_fallthru
      _
    // Predicated region
    $region14: #{forward.1} parent=1 // pred_check
      _
    $region15: #{forward.1} parent=1 // pred_check_branch
      %38 = sbr.rel (0) target = $region17
    $region16: #{forward.1} parent=1 // pred_region
      %39 = dma.done [#allocation3], 384
    $region17: #{forward.1} parent=1 // pred_fallthru
      _
    // Predicated region
    $region18: #{forward.1} parent=1 // pred_check
      _
    $region19: #{forward.1} parent=1 // pred_check_branch
      %41 = sbr.rel (0) target = $region21
    $region20: #{forward.1} parent=1 // pred_region
      %42 = dma.done [#allocation6], 16384
    $region21: #{forward.1} parent=1 // pred_fallthru
      _
    %v43 = vld [vmem:[%s0] sm:$0xff]
    %v44 = vld [vmem:[#allocation2] sm:$0x1]
    %v45 = vld [vmem:[#allocation2 + $0x1] sm:$0x1]
    %v46 = vrot.slane %v43, 4
    %v47 = vadd.f32 %v43, %v46
    %v48 = vrot.slane %v47, 2
    %v49 = vadd.f32 %v47, %v48
    %v50 = vrot.slane %v49, 1
    %v51 = vadd.f32 %v49, %v50
    %v52 = vrcp.pop 8.0
    %v53 = vmul.f32 %v51, %v52
    %v54 = vmul.f32 %v43, %v43
    %v55 = vrot.slane %v54, 4
    %v56 = vadd.f32 %v54, %v55
    %v57 = vrot.slane %v56, 2
    %v58 = vadd.f32 %v56, %v57
    %v59 = vrot.slane %v58, 1
    %v60 = vadd.f32 %v58, %v59
    %v61 = vmul.f32 %v60, %v52
    %v62 = vmul.f32 %v53, %v53
    %v63 = vsub.f32 %v61, %v62
    %v64 = vmax.f32 %v63, 0.0
    %v65 = vadd.f32 %v64, 1e-05
    %v66 = vrsqrt.pop %v65
    %v67 = vmul.f32 %v44, %v66
    %v68 = vlaneseq
    %v69 = vshrl.u32 %v68, 7
    %v70 = vsub.s32 0, %v69
    %v71 = vrot.slane %v67, %v70
    %v72 = vmul.f32 %v43, %v71
    %v73 = vmul.f32 %v53, %v67
    %v74 = vsub.f32 %v45, %v73
    %v75 = vlaneseq
    %v76 = vshrl.u32 %v75, 7
    %v77 = vsub.s32 0, %v76
    %v78 = vrot.slane %v74, %v77
    %v79 = vadd.f32 %v72, %v78
    %v80 = vmax.f32 %v79, 0.0
    %v81 = vld [vmem:[#allocation5] sm:$0xff]
    %v82 = vld [vmem:[#allocation5 + $0x8] sm:$0xff]
    %v83 = vld [vmem:[#allocation5 + $0x10] sm:$0xff]
    %v84 = vld [vmem:[#allocation5 + $0x18] sm:$0xff]
    %v85 = vld [vmem:[#allocation5 + $0x20] sm:$0xff]
    %v86 = vld [vmem:[#allocation5 + $0x28] sm:$0xff]
    %v87 = vld [vmem:[#allocation5 + $0x30] sm:$0xff]
    %v88 = vld [vmem:[#allocation5 + $0x38] sm:$0xff]
    %v89 = vld [vmem:[#allocation5 + $0x40] sm:$0xff]
    %v90 = vld [vmem:[#allocation5 + $0x48] sm:$0xff]
    %v91 = vld [vmem:[#allocation5 + $0x50] sm:$0xff]
    %v92 = vld [vmem:[#allocation5 + $0x58] sm:$0xff]
    %v93 = vld [vmem:[#allocation5 + $0x60] sm:$0xff]
    %v94 = vld [vmem:[#allocation5 + $0x68] sm:$0xff]
    %v95 = vld [vmem:[#allocation5 + $0x70] sm:$0xff]
    %v96 = vld [vmem:[#allocation5 + $0x78] sm:$0xff]
    %97 = vmatprep.subr.mxu0 0.0
    %98 = vmatpush1.msra.mxu0 %v81
    %99 = vmatprep.subr.mxu0 0.0
    %100 = vmatpush1.msra.mxu0 %v82
    %101 = vmatprep.subr.mxu0 0.0
    %102 = vmatpush1.msra.mxu0 %v83
    %103 = vmatprep.subr.mxu0 0.0
    %104 = vmatpush1.msra.mxu0 %v84
    %105 = vmatprep.subr.mxu0 0.0
    %106 = vmatpush1.msra.mxu0 %v85
    %107 = vmatprep.subr.mxu0 0.0
    %108 = vmatpush1.msra.mxu0 %v86
    %109 = vmatprep.subr.mxu0 0.0
    %110 = vmatpush1.msra.mxu0 %v87
    %111 = vmatprep.subr.mxu0 0.0
    %112 = vmatpush1.msra.mxu0 %v88
    %113 = vmatprep.subr.mxu0 0.0
    %114 = vmatpush1.msra.mxu0 %v89
    %115 = vmatprep.subr.mxu0 0.0
    %116 = vmatpush1.msra.mxu0 %v90
    %117 = vmatprep.subr.mxu0 0.0
    %118 = vmatpush1.msra.mxu0 %v91
    %119 = vmatprep.subr.mxu0 0.0
    %120 = vmatpush1.msra.mxu0 %v92
    %121 = vmatprep.subr.mxu0 0.0
    %122 = vmatpush1.msra.mxu0 %v93
    %123 = vmatprep.subr.mxu0 0.0
    %124 = vmatpush1.msra.mxu0 %v94
    %125 = vmatprep.subr.mxu0 0.0
    %126 = vmatpush1.msra.mxu0 %v95
    %127 = vmatprep.subr.mxu0 0.0
    %128 = vmatpush1.msra.mxu0 %v96
    %129 = vmatprep.subr.mxu0 0.0
    %130 = vmatpush1.msra.mxu0 0.0
    %131 = vmatprep.subr.mxu0 0.0
    %132 = vmatpush1.msra.mxu0 0.0
    %133 = vmatprep.subr.mxu0 0.0
    %134 = vmatpush1.msra.mxu0 0.0
    %135 = vmatprep.subr.mxu0 0.0
    %136 = vmatpush1.msra.mxu0 0.0
    %137 = vmatprep.subr.mxu0 0.0
    %138 = vmatpush1.msra.mxu0 0.0
    %139 = vmatprep.subr.mxu0 0.0
    %140 = vmatpush1.msra.mxu0 0.0
    %141 = vmatprep.subr.mxu0 0.0
    %142 = vmatpush1.msra.mxu0 0.0
    %143 = vmatprep.subr.mxu0 0.0
    %144 = vmatpush1.msra.mxu0 0.0
    %145 = vmatprep.subr.mxu0 0.0
    %146 = vmatpush1.msra.mxu0 0.0
    %147 = vmatprep.subr.mxu0 0.0
    %148 = vmatpush1.msra.mxu0 0.0
    %149 = vmatprep.subr.mxu0 0.0
    %150 = vmatpush1.msra.mxu0 0.0
    %151 = vmatprep.subr.mxu0 0.0
    %152 = vmatpush1.msra.mxu0 0.0
    %153 = vmatprep.subr.mxu0 0.0
    %154 = vmatpush1.msra.mxu0 0.0
    %155 = vmatprep.subr.mxu0 0.0
    %156 = vmatpush1.msra.mxu0 0.0
    %157 = vmatprep.subr.mxu0 0.0
    %158 = vmatpush1.msra.mxu0 0.0
    %159 = vmatprep.subr.mxu0 0.0
    %160 = vmatpush1.msra.mxu0 0.0
    %161 = vmatprep.mubr.f32.mxu0 0.0
    %162 = vmatmul.mubr.f32.gmra.mrb[0].mxu0 %v80
    %v163 = vpop.f32.mrb[0].mxu0
    %v164 = vadd.f32 0.0, %v163
    %v165 = vpop.f32.mrb[0].mxu0
    %166 = vdwg.mxu0
    %v167 = vld [vmem:[#allocation2 + $0x2] sm:$0x1]
    %v168 = vld [vmem:[#allocation2 + $0x3] sm:$0x1]
    %v169 = vrot.slane %v164, 4
    %v170 = vadd.f32 %v164, %v169
    %v171 = vrot.slane %v170, 2
    %v172 = vadd.f32 %v170, %v171
    %v173 = vrot.slane %v172, 1
    %v174 = vadd.f32 %v172, %v173
    %v175 = vmul.f32 %v174, %v52
    %v176 = vmul.f32 %v164, %v164
    %v177 = vrot.slane %v176, 4
    %v178 = vadd.f32 %v176, %v177
    %v179 = vrot.slane %v178, 2
    %v180 = vadd.f32 %v178, %v179
    %v181 = vrot.slane %v180, 1
    %v182 = vadd.f32 %v180, %v181
    %v183 = vmul.f32 %v182, %v52
    %v184 = vmul.f32 %v175, %v175
    %v185 = vsub.f32 %v183, %v184
    %v186 = vmax.f32 %v185, 0.0
    %v187 = vadd.f32 %v186, 1e-05
    %v188 = vrsqrt.pop %v187
    %v189 = vmul.f32 %v167, %v188
    %v190 = vlaneseq
    %v191 = vshrl.u32 %v190, 7
    %v192 = vsub.s32 0, %v191
    %v193 = vrot.slane %v189, %v192
    %v194 = vmul.f32 %v164, %v193
    %v195 = vmul.f32 %v175, %v189
    %v196 = vsub.f32 %v168, %v195
    %v197 = vlaneseq
    %v198 = vshrl.u32 %v197, 7
    %v199 = vsub.s32 0, %v198
    %v200 = vrot.slane %v196, %v199
    %v201 = vadd.f32 %v194, %v200
    %v202 = vmax.f32 %v201, 0.0
    %v203 = vld [vmem:[#allocation2 + $0x4] sm:$0x1]
    %v204 = vld [vmem:[#allocation5 + $0x80] sm:$0xff]
    %v205 = vld [vmem:[#allocation5 + $0x88] sm:$0xff]
    %v206 = vld [vmem:[#allocation5 + $0x90] sm:$0xff]
    %v207 = vld [vmem:[#allocation5 + $0x98] sm:$0xff]
    %v208 = vld [vmem:[#allocation5 + $0xa0] sm:$0xff]
    %v209 = vld [vmem:[#allocation5 + $0xa8] sm:$0xff]
    %v210 = vld [vmem:[#allocation5 + $0xb0] sm:$0xff]
    %v211 = vld [vmem:[#allocation5 + $0xb8] sm:$0xff]
    %v212 = vld [vmem:[#allocation5 + $0xc0] sm:$0xff]
    %v213 = vld [vmem:[#allocation5 + $0xc8] sm:$0xff]
    %v214 = vld [vmem:[#allocation5 + $0xd0] sm:$0xff]
    %v215 = vld [vmem:[#allocation5 + $0xd8] sm:$0xff]
    %v216 = vld [vmem:[#allocation5 + $0xe0] sm:$0xff]
    %v217 = vld [vmem:[#allocation5 + $0xe8] sm:$0xff]
    %v218 = vld [vmem:[#allocation5 + $0xf0] sm:$0xff]
    %v219 = vld [vmem:[#allocation5 + $0xf8] sm:$0xff]
    %v220 = vld [vmem:[#allocation5 + $0x100] sm:$0xff]
    %v221 = vld [vmem:[#allocation5 + $0x108] sm:$0xff]
    %v222 = vld [vmem:[#allocation5 + $0x110] sm:$0xff]
    %v223 = vld [vmem:[#allocation5 + $0x118] sm:$0xff]
    %v224 = vld [vmem:[#allocation5 + $0x120] sm:$0xff]
    %v225 = vld [vmem:[#allocation5 + $0x128] sm:$0xff]
    %v226 = vld [vmem:[#allocation5 + $0x130] sm:$0xff]
    %v227 = vld [vmem:[#allocation5 + $0x138] sm:$0xff]
    %v228 = vld [vmem:[#allocation5 + $0x140] sm:$0xff]
    %v229 = vld [vmem:[#allocation5 + $0x148] sm:$0xff]
    %v230 = vld [vmem:[#allocation5 + $0x150] sm:$0xff]
    %v231 = vld [vmem:[#allocation5 + $0x158] sm:$0xff]
    %v232 = vld [vmem:[#allocation5 + $0x160] sm:$0xff]
    %v233 = vld [vmem:[#allocation5 + $0x168] sm:$0xff]
    %v234 = vld [vmem:[#allocation5 + $0x170] sm:$0xff]
    %v235 = vld [vmem:[#allocation5 + $0x178] sm:$0xff]
    %v236 = vlaneseq
    %v237 = vshrl.u32 %v236, 7
    %v238 = vsub.s32 0, %v237
    %v239 = vrot.slane %v203, %v238
    %240 = vmatprep.subr.mxu0 0.0
    %241 = vmatpush1.msra.mxu0 %v204
    %242 = vmatprep.subr.mxu0 0.0
    %243 = vmatpush1.msra.mxu0 %v205
    %244 = vmatprep.subr.mxu0 0.0
    %245 = vmatpush1.msra.mxu0 %v206
    %246 = vmatprep.subr.mxu0 0.0
    %247 = vmatpush1.msra.mxu0 %v207
    %248 = vmatprep.subr.mxu0 0.0
    %249 = vmatpush1.msra.mxu0 %v208
    %250 = vmatprep.subr.mxu0 0.0
    %251 = vmatpush1.msra.mxu0 %v209
    %252 = vmatprep.subr.mxu0 0.0
    %253 = vmatpush1.msra.mxu0 %v210
    %254 = vmatprep.subr.mxu0 0.0
    %255 = vmatpush1.msra.mxu0 %v211
    %256 = vmatprep.subr.mxu0 0.0
    %257 = vmatpush1.msra.mxu0 %v212
    %258 = vmatprep.subr.mxu0 0.0
    %259 = vmatpush1.msra.mxu0 %v213
    %260 = vmatprep.subr.mxu0 0.0
    %261 = vmatpush1.msra.mxu0 %v214
    %262 = vmatprep.subr.mxu0 0.0
    %263 = vmatpush1.msra.mxu0 %v215
    %264 = vmatprep.subr.mxu0 0.0
    %265 = vmatpush1.msra.mxu0 %v216
    %266 = vmatprep.subr.mxu0 0.0
    %267 = vmatpush1.msra.mxu0 %v217
    %268 = vmatprep.subr.mxu0 0.0
    %269 = vmatpush1.msra.mxu0 %v218
    %270 = vmatprep.subr.mxu0 0.0
    %271 = vmatpush1.msra.mxu0 %v219
    %272 = vmatprep.subr.mxu0 0.0
    %273 = vmatpush1.msra.mxu0 %v220
    %274 = vmatprep.subr.mxu0 0.0
    %275 = vmatpush1.msra.mxu0 %v221
    %276 = vmatprep.subr.mxu0 0.0
    %277 = vmatpush1.msra.mxu0 %v222
    %278 = vmatprep.subr.mxu0 0.0
    %279 = vmatpush1.msra.mxu0 %v223
    %280 = vmatprep.subr.mxu0 0.0
    %281 = vmatpush1.msra.mxu0 %v224
    %282 = vmatprep.subr.mxu0 0.0
    %283 = vmatpush1.msra.mxu0 %v225
    %284 = vmatprep.subr.mxu0 0.0
    %285 = vmatpush1.msra.mxu0 %v226
    %286 = vmatprep.subr.mxu0 0.0
    %287 = vmatpush1.msra.mxu0 %v227
    %288 = vmatprep.subr.mxu0 0.0
    %289 = vmatpush1.msra.mxu0 %v228
    %290 = vmatprep.subr.mxu0 0.0
    %291 = vmatpush1.msra.mxu0 %v229
    %292 = vmatprep.subr.mxu0 0.0
    %293 = vmatpush1.msra.mxu0 %v230
    %294 = vmatprep.subr.mxu0 0.0
    %295 = vmatpush1.msra.mxu0 %v231
    %296 = vmatprep.subr.mxu0 0.0
    %297 = vmatpush1.msra.mxu0 %v232
    %298 = vmatprep.subr.mxu0 0.0
    %299 = vmatpush1.msra.mxu0 %v233
    %300 = vmatprep.subr.mxu0 0.0
    %301 = vmatpush1.msra.mxu0 %v234
    %302 = vmatprep.subr.mxu0 0.0
    %303 = vmatpush1.msra.mxu0 %v235
    %304 = vmatprep.mubr.f32.mxu0 %v43
    %305 = vmatmul.mubr.f32.gmra.mrb[0].mxu0 %v202
    %v306 = vpop.f32.mrb[0].mxu0
    %v307 = vadd.f32 %v239, %v306
    %v308 = vpop.f32.mrb[0].mxu0
    %309 = vdwg.mxu0
    %v310 = vld [vmem:[#allocation2 + $0x8] sm:$0x1]
    %v311 = vld [vmem:[#allocation2 + $0x9] sm:$0x1]
    %v312 = vrot.slane %v307, 4
    %v313 = vadd.f32 %v307, %v312
    %v314 = vrot.slane %v313, 2
    %v315 = vadd.f32 %v313, %v314
    %v316 = vrot.slane %v315, 1
    %v317 = vadd.f32 %v315, %v316
    %v318 = vmul.f32 %v317, %v52
    %v319 = vmul.f32 %v307, %v307
    %v320 = vrot.slane %v319, 4
    %v321 = vadd.f32 %v319, %v320
    %v322 = vrot.slane %v321, 2
    %v323 = vadd.f32 %v321, %v322
    %v324 = vrot.slane %v323, 1
    %v325 = vadd.f32 %v323, %v324
    %v326 = vmul.f32 %v325, %v52
    %v327 = vmul.f32 %v318, %v318
    %v328 = vsub.f32 %v326, %v327
    %v329 = vmax.f32 %v328, 0.0
    %v330 = vadd.f32 %v329, 1e-05
    %v331 = vrsqrt.pop %v330
    %v332 = vmul.f32 %v310, %v331
    %v333 = vlaneseq
    %v334 = vshrl.u32 %v333, 7
    %v335 = vsub.s32 0, %v334
    %v336 = vrot.slane %v332, %v335
    %v337 = vmul.f32 %v307, %v336
    %v338 = vmul.f32 %v318, %v332
    %v339 = vsub.f32 %v311, %v338
    %v340 = vlaneseq
    %v341 = vshrl.u32 %v340, 7
    %v342 = vsub.s32 0, %v341
    %v343 = vrot.slane %v339, %v342
    %v344 = vadd.f32 %v337, %v343
    %v345 = vmax.f32 %v344, 0.0
    %v346 = vld [vmem:[#allocation5 + $0x180] sm:$0xff]
    %v347 = vld [vmem:[#allocation5 + $0x188] sm:$0xff]
    %v348 = vld [vmem:[#allocation5 + $0x190] sm:$0xff]
    %v349 = vld [vmem:[#allocation5 + $0x198] sm:$0xff]
    %v350 = vld [vmem:[#allocation5 + $0x1a0] sm:$0xff]
    %v351 = vld [vmem:[#allocation5 + $0x1a8] sm:$0xff]
    %v352 = vld [vmem:[#allocation5 + $0x1b0] sm:$0xff]
    %v353 = vld [vmem:[#allocation5 + $0x1b8] sm:$0xff]
    %v354 = vld [vmem:[#allocation5 + $0x1c0] sm:$0xff]
    %v355 = vld [vmem:[#allocation5 + $0x1c8] sm:$0xff]
    %v356 = vld [vmem:[#allocation5 + $0x1d0] sm:$0xff]
    %v357 = vld [vmem:[#allocation5 + $0x1d8] sm:$0xff]
    %v358 = vld [vmem:[#allocation5 + $0x1e0] sm:$0xff]
    %v359 = vld [vmem:[#allocation5 + $0x1e8] sm:$0xff]
    %v360 = vld [vmem:[#allocation5 + $0x1f0] sm:$0xff]
    %v361 = vld [vmem:[#allocation5 + $0x1f8] sm:$0xff]
    %362 = vmatprep.subr.mxu0 0.0
    %363 = vmatpush1.msra.mxu0 %v346
    %364 = vmatprep.subr.mxu0 0.0
    %365 = vmatpush1.msra.mxu0 %v347
    %366 = vmatprep.subr.mxu0 0.0
    %367 = vmatpush1.msra.mxu0 %v348
    %368 = vmatprep.subr.mxu0 0.0
    %369 = vmatpush1.msra.mxu0 %v349
    %370 = vmatprep.subr.mxu0 0.0
    %371 = vmatpush1.msra.mxu0 %v350
    %372 = vmatprep.subr.mxu0 0.0
    %373 = vmatpush1.msra.mxu0 %v351
    %374 = vmatprep.subr.mxu0 0.0
    %375 = vmatpush1.msra.mxu0 %v352
    %376 = vmatprep.subr.mxu0 0.0
    %377 = vmatpush1.msra.mxu0 %v353
    %378 = vmatprep.subr.mxu0 0.0
    %379 = vmatpush1.msra.mxu0 %v354
    %380 = vmatprep.subr.mxu0 0.0
    %381 = vmatpush1.msra.mxu0 %v355
    %382 = vmatprep.subr.mxu0 0.0
    %383 = vmatpush1.msra.mxu0 %v356
    %384 = vmatprep.subr.mxu0 0.0
    %385 = vmatpush1.msra.mxu0 %v357
    %386 = vmatprep.subr.mxu0 0.0
    %387 = vmatpush1.msra.mxu0 %v358
    %388 = vmatprep.subr.mxu0 0.0
    %389 = vmatpush1.msra.mxu0 %v359
    %390 = vmatprep.subr.mxu0 0.0
    %391 = vmatpush1.msra.mxu0 %v360
    %392 = vmatprep.subr.mxu0 0.0
    %393 = vmatpush1.msra.mxu0 %v361
    %394 = vmatprep.subr.mxu0 0.0
    %395 = vmatpush1.msra.mxu0 0.0
    %396 = vmatprep.subr.mxu0 0.0
    %397 = vmatpush1.msra.mxu0 0.0
    %398 = vmatprep.subr.mxu0 0.0
    %399 = vmatpush1.msra.mxu0 0.0
    %400 = vmatprep.subr.mxu0 0.0
    %401 = vmatpush1.msra.mxu0 0.0
    %402 = vmatprep.subr.mxu0 0.0
    %403 = vmatpush1.msra.mxu0 0.0
    %404 = vmatprep.subr.mxu0 0.0
    %405 = vmatpush1.msra.mxu0 0.0
    %406 = vmatprep.subr.mxu0 0.0
    %407 = vmatpush1.msra.mxu0 0.0
    %408 = vmatprep.subr.mxu0 0.0
    %409 = vmatpush1.msra.mxu0 0.0
    %410 = vmatprep.subr.mxu0 0.0
    %411 = vmatpush1.msra.mxu0 0.0
    %412 = vmatprep.subr.mxu0 0.0
    %413 = vmatpush1.msra.mxu0 0.0
    %414 = vmatprep.subr.mxu0 0.0
    %415 = vmatpush1.msra.mxu0 0.0
    %416 = vmatprep.subr.mxu0 0.0
    %417 = vmatpush1.msra.mxu0 0.0
    %418 = vmatprep.subr.mxu0 0.0
    %419 = vmatpush1.msra.mxu0 0.0
    %420 = vmatprep.subr.mxu0 0.0
    %421 = vmatpush1.msra.mxu0 0.0
    %422 = vmatprep.subr.mxu0 0.0
    %423 = vmatpush1.msra.mxu0 0.0
    %424 = vmatprep.subr.mxu0 0.0
    %425 = vmatpush1.msra.mxu0 0.0
    %426 = vmatprep.mubr.f32.mxu0 0.0
    %427 = vmatmul.mubr.f32.gmra.mrb[0].mxu0 %v345
    %v428 = vpop.f32.mrb[0].mxu0
    %v429 = vadd.f32 0.0, %v428
    %v430 = vpop.f32.mrb[0].mxu0
    %431 = vdwg.mxu0
    %v432 = vld [vmem:[#allocation2 + $0xa] sm:$0x1]
    %v433 = vld [vmem:[#allocation2 + $0xb] sm:$0x1]
    %v434 = vrot.slane %v429, 4
    %v435 = vadd.f32 %v429, %v434
    %v436 = vrot.slane %v435, 2
    %v437 = vadd.f32 %v435, %v436
    %v438 = vrot.slane %v437, 1
    %v439 = vadd.f32 %v437, %v438
    %v440 = vmul.f32 %v439, %v52
    %v441 = vmul.f32 %v429, %v429
    %v442 = vrot.slane %v441, 4
    %v443 = vadd.f32 %v441, %v442
    %v444 = vrot.slane %v443, 2
    %v445 = vadd.f32 %v443, %v444
    %v446 = vrot.slane %v445, 1
    %v447 = vadd.f32 %v445, %v446
    %v448 = vmul.f32 %v447, %v52
    %v449 = vmul.f32 %v440, %v440
    %v450 = vsub.f32 %v448, %v449
    %v451 = vmax.f32 %v450, 0.0
    %v452 = vadd.f32 %v451, 1e-05
    %v453 = vrsqrt.pop %v452
    %v454 = vmul.f32 %v432, %v453
    %v455 = vlaneseq
    %v456 = vshrl.u32 %v455, 7
    %v457 = vsub.s32 0, %v456
    %v458 = vrot.slane %v454, %v457
    %v459 = vmul.f32 %v429, %v458
    %v460 = vmul.f32 %v440, %v454
    %v461 = vsub.f32 %v433, %v460
    %v462 = vlaneseq
    %v463 = vshrl.u32 %v462, 7
    %v464 = vsub.s32 0, %v463
    %v465 = vrot.slane %v461, %v464
    %v466 = vadd.f32 %v459, %v465
    %v467 = vmax.f32 %v466, 0.0
    %v468 = vld [vmem:[#allocation2 + $0xc] sm:$0x1]
    %v469 = vld [vmem:[#allocation5 + $0x200] sm:$0xff]
    %v470 = vld [vmem:[#allocation5 + $0x208] sm:$0xff]
    %v471 = vld [vmem:[#allocation5 + $0x210] sm:$0xff]
    %v472 = vld [vmem:[#allocation5 + $0x218] sm:$0xff]
    %v473 = vld [vmem:[#allocation5 + $0x220] sm:$0xff]
    %v474 = vld [vmem:[#allocation5 + $0x228] sm:$0xff]
    %v475 = vld [vmem:[#allocation5 + $0x230] sm:$0xff]
    %v476 = vld [vmem:[#allocation5 + $0x238] sm:$0xff]
    %v477 = vld [vmem:[#allocation5 + $0x240] sm:$0xff]
    %v478 = vld [vmem:[#allocation5 + $0x248] sm:$0xff]
    %v479 = vld [vmem:[#allocation5 + $0x250] sm:$0xff]
    %v480 = vld [vmem:[#allocation5 + $0x258] sm:$0xff]
    %v481 = vld [vmem:[#allocation5 + $0x260] sm:$0xff]
    %v482 = vld [vmem:[#allocation5 + $0x268] sm:$0xff]
    %v483 = vld [vmem:[#allocation5 + $0x270] sm:$0xff]
    %v484 = vld [vmem:[#allocation5 + $0x278] sm:$0xff]
    %485 = vmatprep.subr.mxu0 0.0
    %486 = vmatpush1.msra.mxu0 %v469
    %487 = vmatprep.subr.mxu0 0.0
    %488 = vmatpush1.msra.mxu0 %v470
    %489 = vmatprep.subr.mxu0 0.0
    %490 = vmatpush1.msra.mxu0 %v471
    %491 = vmatprep.subr.mxu0 0.0
    %492 = vmatpush1.msra.mxu0 %v472
    %493 = vmatprep.subr.mxu0 0.0
    %494 = vmatpush1.msra.mxu0 %v473
    %495 = vmatprep.subr.mxu0 0.0
    %496 = vmatpush1.msra.mxu0 %v474
    %497 = vmatprep.subr.mxu0 0.0
    %498 = vmatpush1.msra.mxu0 %v475
    %499 = vmatprep.subr.mxu0 0.0
    %500 = vmatpush1.msra.mxu0 %v476
    %501 = vmatprep.subr.mxu0 0.0
    %502 = vmatpush1.msra.mxu0 %v477
    %503 = vmatprep.subr.mxu0 0.0
    %504 = vmatpush1.msra.mxu0 %v478
    %505 = vmatprep.subr.mxu0 0.0
    %506 = vmatpush1.msra.mxu0 %v479
    %507 = vmatprep.subr.mxu0 0.0
    %508 = vmatpush1.msra.mxu0 %v480
    %509 = vmatprep.subr.mxu0 0.0
    %510 = vmatpush1.msra.mxu0 %v481
    %511 = vmatprep.subr.mxu0 0.0
    %512 = vmatpush1.msra.mxu0 %v482
    %513 = vmatprep.subr.mxu0 0.0
    %514 = vmatpush1.msra.mxu0 %v483
    %515 = vmatprep.subr.mxu0 0.0
    %516 = vmatpush1.msra.mxu0 %v484
    %517 = vmatprep.subr.mxu0 0.0
    %518 = vmatpush1.msra.mxu0 0.0
    %519 = vmatprep.subr.mxu0 0.0
    %520 = vmatpush1.msra.mxu0 0.0
    %521 = vmatprep.subr.mxu0 0.0
    %522 = vmatpush1.msra.mxu0 0.0
    %523 = vmatprep.subr.mxu0 0.0
    %524 = vmatpush1.msra.mxu0 0.0
    %525 = vmatprep.subr.mxu0 0.0
    %526 = vmatpush1.msra.mxu0 0.0
    %527 = vmatprep.subr.mxu0 0.0
    %528 = vmatpush1.msra.mxu0 0.0
    %529 = vmatprep.subr.mxu0 0.0
    %530 = vmatpush1.msra.mxu0 0.0
    %531 = vmatprep.subr.mxu0 0.0
    %532 = vmatpush1.msra.mxu0 0.0
    %533 = vmatprep.subr.mxu0 0.0
    %534 = vmatpush1.msra.mxu0 0.0
    %535 = vmatprep.subr.mxu0 0.0
    %536 = vmatpush1.msra.mxu0 0.0
    %537 = vmatprep.subr.mxu0 0.0
    %538 = vmatpush1.msra.mxu0 0.0
    %539 = vmatprep.subr.mxu0 0.0
    %540 = vmatpush1.msra.mxu0 0.0
    %541 = vmatprep.subr.mxu0 0.0
    %542 = vmatpush1.msra.mxu0 0.0
    %543 = vmatprep.subr.mxu0 0.0
    %544 = vmatpush1.msra.mxu0 0.0
    %545 = vmatprep.subr.mxu0 0.0
    %546 = vmatpush1.msra.mxu0 0.0
    %547 = vmatprep.subr.mxu0 0.0
    %548 = vmatpush1.msra.mxu0 0.0
    %549 = vmatprep.mubr.f32.mxu0 0.0
    %550 = vmatmul.mubr.f32.gmra.mrb[0].mxu0 %v467
    %v551 = vpop.f32.mrb[0].mxu0
    %v552 = vadd.f32 0.0, %v551
    %v553 = vpop.f32.mrb[0].mxu0
    %554 = vdwg.mxu0
    %v555 = vadd.f32 %v307, %v552
    %v556 = vlaneseq
    %v557 = vshrl.u32 %v556, 7
    %v558 = vsub.s32 0, %v557
    %v559 = vrot.slane %v468, %v558
    %v560 = vadd.f32 %v555, %v559
    %v561 = vld [vmem:[#allocation2 + $0x10] sm:$0x1]
    %v562 = vld [vmem:[#allocation2 + $0x11] sm:$0x1]
    %v563 = vrot.slane %v560, 4
    %v564 = vadd.f32 %v560, %v563
    %v565 = vrot.slane %v564, 2
    %v566 = vadd.f32 %v564, %v565
    %v567 = vrot.slane %v566, 1
    %v568 = vadd.f32 %v566, %v567
    %v569 = vmul.f32 %v568, %v52
    %v570 = vmul.f32 %v560, %v560
    %v571 = vrot.slane %v570, 4
    %v572 = vadd.f32 %v570, %v571
    %v573 = vrot.slane %v572, 2
    %v574 = vadd.f32 %v572, %v573
    %v575 = vrot.slane %v574, 1
    %v576 = vadd.f32 %v574, %v575
    %v577 = vmul.f32 %v576, %v52
    %v578 = vmul.f32 %v569, %v569
    %v579 = vsub.f32 %v577, %v578
    %v580 = vmax.f32 %v579, 0.0
    %v581 = vadd.f32 %v580, 1e-05
    %v582 = vrsqrt.pop %v581
    %v583 = vmul.f32 %v561, %v582
    %v584 = vlaneseq
    %v585 = vshrl.u32 %v584, 7
    %v586 = vsub.s32 0, %v585
    %v587 = vrot.slane %v583, %v586
    %v588 = vmul.f32 %v560, %v587
    %v589 = vmul.f32 %v569, %v583
    %v590 = vsub.f32 %v562, %v589
    %v591 = vlaneseq
    %v592 = vshrl.u32 %v591, 7
    %v593 = vsub.s32 0, %v592
    %v594 = vrot.slane %v590, %v593
    %v595 = vadd.f32 %v588, %v594
    %v596 = vld [vmem:[#allocation5 + $0x280] sm:$0xff]
    %v597 = vld [vmem:[#allocation5 + $0x288] sm:$0xff]
    %v598 = vld [vmem:[#allocation5 + $0x290] sm:$0xff]
    %v599 = vld [vmem:[#allocation5 + $0x298] sm:$0xff]
    %v600 = vld [vmem:[#allocation5 + $0x2a0] sm:$0xff]
    %v601 = vld [vmem:[#allocation5 + $0x2a8] sm:$0xff]
    %v602 = vld [vmem:[#allocation5 + $0x2b0] sm:$0xff]
    %v603 = vld [vmem:[#allocation5 + $0x2b8] sm:$0xff]
    %v604 = vld [vmem:[#allocation5 + $0x2c0] sm:$0xff]
    %v605 = vld [vmem:[#allocation5 + $0x2c8] sm:$0xff]
    %v606 = vld [vmem:[#allocation5 + $0x2d0] sm:$0xff]
    %v607 = vld [vmem:[#allocation5 + $0x2d8] sm:$0xff]
    %v608 = vld [vmem:[#allocation5 + $0x2e0] sm:$0xff]
    %v609 = vld [vmem:[#allocation5 + $0x2e8] sm:$0xff]
    %v610 = vld [vmem:[#allocation5 + $0x2f0] sm:$0xff]
    %v611 = vld [vmem:[#allocation5 + $0x2f8] sm:$0xff]
    %612 = vmatprep.subr.mxu0 0.0
    %613 = vmatpush1.msra.mxu0 %v596
    %614 = vmatprep.subr.mxu0 0.0
    %615 = vmatpush1.msra.mxu0 %v597
    %616 = vmatprep.subr.mxu0 0.0
    %617 = vmatpush1.msra.mxu0 %v598
    %618 = vmatprep.subr.mxu0 0.0
    %619 = vmatpush1.msra.mxu0 %v599
    %620 = vmatprep.subr.mxu0 0.0
    %621 = vmatpush1.msra.mxu0 %v600
    %622 = vmatprep.subr.mxu0 0.0
    %623 = vmatpush1.msra.mxu0 %v601
    %624 = vmatprep.subr.mxu0 0.0
    %625 = vmatpush1.msra.mxu0 %v602
    %626 = vmatprep.subr.mxu0 0.0
    %627 = vmatpush1.msra.mxu0 %v603
    %628 = vmatprep.subr.mxu0 0.0
    %629 = vmatpush1.msra.mxu0 %v604
    %630 = vmatprep.subr.mxu0 0.0
    %631 = vmatpush1.msra.mxu0 %v605
    %632 = vmatprep.subr.mxu0 0.0
    %633 = vmatpush1.msra.mxu0 %v606
    %634 = vmatprep.subr.mxu0 0.0
    %635 = vmatpush1.msra.mxu0 %v607
    %636 = vmatprep.subr.mxu0 0.0
    %637 = vmatpush1.msra.mxu0 %v608
    %638 = vmatprep.subr.mxu0 0.0
    %639 = vmatpush1.msra.mxu0 %v609
    %640 = vmatprep.subr.mxu0 0.0
    %641 = vmatpush1.msra.mxu0 %v610
    %642 = vmatprep.subr.mxu0 0.0
    %643 = vmatpush1.msra.mxu0 %v611
    %644 = vmatprep.subr.mxu0 0.0
    %645 = vmatpush1.msra.mxu0 0.0
    %646 = vmatprep.subr.mxu0 0.0
    %647 = vmatpush1.msra.mxu0 0.0
    %648 = vmatprep.subr.mxu0 0.0
    %649 = vmatpush1.msra.mxu0 0.0
    %650 = vmatprep.subr.mxu0 0.0
    %651 = vmatpush1.msra.mxu0 0.0
    %652 = vmatprep.subr.mxu0 0.0
    %653 = vmatpush1.msra.mxu0 0.0
    %654 = vmatprep.subr.mxu0 0.0
    %655 = vmatpush1.msra.mxu0 0.0
    %656 = vmatprep.subr.mxu0 0.0
    %657 = vmatpush1.msra.mxu0 0.0
    %658 = vmatprep.subr.mxu0 0.0
    %659 = vmatpush1.msra.mxu0 0.0
    %660 = vmatprep.subr.mxu0 0.0
    %661 = vmatpush1.msra.mxu0 0.0
    %662 = vmatprep.subr.mxu0 0.0
    %663 = vmatpush1.msra.mxu0 0.0
    %664 = vmatprep.subr.mxu0 0.0
    %665 = vmatpush1.msra.mxu0 0.0
    %666 = vmatprep.subr.mxu0 0.0
    %667 = vmatpush1.msra.mxu0 0.0
    %668 = vmatprep.subr.mxu0 0.0
    %669 = vmatpush1.msra.mxu0 0.0
    %670 = vmatprep.subr.mxu0 0.0
    %671 = vmatpush1.msra.mxu0 0.0
    %672 = vmatprep.subr.mxu0 0.0
    %673 = vmatpush1.msra.mxu0 0.0
    %674 = vmatprep.subr.mxu0 0.0
    %675 = vmatpush1.msra.mxu0 0.0
    %676 = vmatprep.mubr.f32.mxu0 0.0
    %677 = vmatmul.mubr.f32.gmra.mrb[0].mxu0 %v595
    %v678 = vpop.f32.mrb[0].mxu0
    %v679 = vadd.f32 0.0, %v678
    %v680 = vpop.f32.mrb[0].mxu0
    %681 = vdwg.mxu0
    %v682 = vld [vmem:[#allocation2 + $0x12] sm:$0x1]
    %v683 = vld [vmem:[#allocation2 + $0x13] sm:$0x1]
    %v684 = vrot.slane %v679, 4
    %v685 = vadd.f32 %v679, %v684
    %v686 = vrot.slane %v685, 2
    %v687 = vadd.f32 %v685, %v686
    %v688 = vrot.slane %v687, 1
    %v689 = vadd.f32 %v687, %v688
    %v690 = vmul.f32 %v689, %v52
    %v691 = vmul.f32 %v679, %v679
    %v692 = vrot.slane %v691, 4
    %v693 = vadd.f32 %v691, %v692
    %v694 = vrot.slane %v693, 2
    %v695 = vadd.f32 %v693, %v694
    %v696 = vrot.slane %v695, 1
    %v697 = vadd.f32 %v695, %v696
    %v698 = vmul.f32 %v697, %v52
    %v699 = vmul.f32 %v690, %v690
    %v700 = vsub.f32 %v698, %v699
    %v701 = vmax.f32 %v700, 0.0
    %v702 = vadd.f32 %v701, 1e-05
    %v703 = vrsqrt.pop %v702
    %v704 = vmul.f32 %v682, %v703
    %v705 = vlaneseq
    %v706 = vshrl.u32 %v705, 7
    %v707 = vsub.s32 0, %v706
    %v708 = vrot.slane %v704, %v707
    %v709 = vmul.f32 %v679, %v708
    %v710 = vmul.f32 %v690, %v704
    %v711 = vsub.f32 %v683, %v710
    %v712 = vlaneseq
    %v713 = vshrl.u32 %v712, 7
    %v714 = vsub.s32 0, %v713
    %v715 = vrot.slane %v711, %v714
    %v716 = vadd.f32 %v709, %v715
    %v717 = vld [vmem:[#allocation2 + $0x14] sm:$0x1]
    %v718 = vld [vmem:[#allocation5 + $0x300] sm:$0xff]
    %v719 = vld [vmem:[#allocation5 + $0x308] sm:$0xff]
    %v720 = vld [vmem:[#allocation5 + $0x310] sm:$0xff]
    %v721 = vld [vmem:[#allocation5 + $0x318] sm:$0xff]
    %v722 = vld [vmem:[#allocation5 + $0x320] sm:$0xff]
    %v723 = vld [vmem:[#allocation5 + $0x328] sm:$0xff]
    %v724 = vld [vmem:[#allocation5 + $0x330] sm:$0xff]
    %v725 = vld [vmem:[#allocation5 + $0x338] sm:$0xff]
    %v726 = vld [vmem:[#allocation5 + $0x340] sm:$0xff]
    %v727 = vld [vmem:[#allocation5 + $0x348] sm:$0xff]
    %v728 = vld [vmem:[#allocation5 + $0x350] sm:$0xff]
    %v729 = vld [vmem:[#allocation5 + $0x358] sm:$0xff]
    %v730 = vld [vmem:[#allocation5 + $0x360] sm:$0xff]
    %v731 = vld [vmem:[#allocation5 + $0x368] sm:$0xff]
    %v732 = vld [vmem:[#allocation5 + $0x370] sm:$0xff]
    %v733 = vld [vmem:[#allocation5 + $0x378] sm:$0xff]
    %v734 = vld [vmem:[#allocation5 + $0x380] sm:$0xff]
    %v735 = vld [vmem:[#allocation5 + $0x388] sm:$0xff]
    %v736 = vld [vmem:[#allocation5 + $0x390] sm:$0xff]
    %v737 = vld [vmem:[#allocation5 + $0x398] sm:$0xff]
    %v738 = vld [vmem:[#allocation5 + $0x3a0] sm:$0xff]
    %v739 = vld [vmem:[#allocation5 + $0x3a8] sm:$0xff]
    %v740 = vld [vmem:[#allocation5 + $0x3b0] sm:$0xff]
    %v741 = vld [vmem:[#allocation5 + $0x3b8] sm:$0xff]
    %v742 = vld [vmem:[#allocation5 + $0x3c0] sm:$0xff]
    %v743 = vld [vmem:[#allocation5 + $0x3c8] sm:$0xff]
    %v744 = vld [vmem:[#allocation5 + $0x3d0] sm:$0xff]
    %v745 = vld [vmem:[#allocation5 + $0x3d8] sm:$0xff]
    %v746 = vld [vmem:[#allocation5 + $0x3e0] sm:$0xff]
    %v747 = vld [vmem:[#allocation5 + $0x3e8] sm:$0xff]
    %v748 = vld [vmem:[#allocation5 + $0x3f0] sm:$0xff]
    %v749 = vld [vmem:[#allocation5 + $0x3f8] sm:$0xff]
    %v750 = vlaneseq
    %v751 = vshrl.u32 %v750, 7
    %v752 = vsub.s32 0, %v751
    %v753 = vrot.slane %v717, %v752
    %754 = vmatprep.subr.mxu0 0.0
    %755 = vmatpush1.msra.mxu0 %v718
    %756 = vmatprep.subr.mxu0 0.0
    %757 = vmatpush1.msra.mxu0 %v719
    %758 = vmatprep.subr.mxu0 0.0
    %759 = vmatpush1.msra.mxu0 %v720
    %760 = vmatprep.subr.mxu0 0.0
    %761 = vmatpush1.msra.mxu0 %v721
    %762 = vmatprep.subr.mxu0 0.0
    %763 = vmatpush1.msra.mxu0 %v722
    %764 = vmatprep.subr.mxu0 0.0
    %765 = vmatpush1.msra.mxu0 %v723
    %766 = vmatprep.subr.mxu0 0.0
    %767 = vmatpush1.msra.mxu0 %v724
    %768 = vmatprep.subr.mxu0 0.0
    %769 = vmatpush1.msra.mxu0 %v725
    %770 = vmatprep.subr.mxu0 0.0
    %771 = vmatpush1.msra.mxu0 %v726
    %772 = vmatprep.subr.mxu0 0.0
    %773 = vmatpush1.msra.mxu0 %v727
    %774 = vmatprep.subr.mxu0 0.0
    %775 = vmatpush1.msra.mxu0 %v728
    %776 = vmatprep.subr.mxu0 0.0
    %777 = vmatpush1.msra.mxu0 %v729
    %778 = vmatprep.subr.mxu0 0.0
    %779 = vmatpush1.msra.mxu0 %v730
    %780 = vmatprep.subr.mxu0 0.0
    %781 = vmatpush1.msra.mxu0 %v731
    %782 = vmatprep.subr.mxu0 0.0
    %783 = vmatpush1.msra.mxu0 %v732
    %784 = vmatprep.subr.mxu0 0.0
    %785 = vmatpush1.msra.mxu0 %v733
    %786 = vmatprep.subr.mxu0 0.0
    %787 = vmatpush1.msra.mxu0 %v734
    %788 = vmatprep.subr.mxu0 0.0
    %789 = vmatpush1.msra.mxu0 %v735
    %790 = vmatprep.subr.mxu0 0.0
    %791 = vmatpush1.msra.mxu0 %v736
    %792 = vmatprep.subr.mxu0 0.0
    %793 = vmatpush1.msra.mxu0 %v737
    %794 = vmatprep.subr.mxu0 0.0
    %795 = vmatpush1.msra.mxu0 %v738
    %796 = vmatprep.subr.mxu0 0.0
    %797 = vmatpush1.msra.mxu0 %v739
    %798 = vmatprep.subr.mxu0 0.0
    %799 = vmatpush1.msra.mxu0 %v740
    %800 = vmatprep.subr.mxu0 0.0
    %801 = vmatpush1.msra.mxu0 %v741
    %802 = vmatprep.subr.mxu0 0.0
    %803 = vmatpush1.msra.mxu0 %v742
    %804 = vmatprep.subr.mxu0 0.0
    %805 = vmatpush1.msra.mxu0 %v743
    %806 = vmatprep.subr.mxu0 0.0
    %807 = vmatpush1.msra.mxu0 %v744
    %808 = vmatprep.subr.mxu0 0.0
    %809 = vmatpush1.msra.mxu0 %v745
    %810 = vmatprep.subr.mxu0 0.0
    %811 = vmatpush1.msra.mxu0 %v746
    %812 = vmatprep.subr.mxu0 0.0
    %813 = vmatpush1.msra.mxu0 %v747
    %814 = vmatprep.subr.mxu0 0.0
    %815 = vmatpush1.msra.mxu0 %v748
    %816 = vmatprep.subr.mxu0 0.0
    %817 = vmatpush1.msra.mxu0 %v749
    %818 = vmatprep.mubr.f32.mxu0 %v560
    %819 = vmatmul.mubr.f32.gmra.mrb[0].mxu0 %v716
    %v820 = vpop.f32.mrb[0].mxu0
    %v821 = vadd.f32 %v753, %v820
    %v822 = vpop.f32.mrb[0].mxu0
    %823 = vdwg.mxu0
    %824 = vst [vmem:[#allocation7] sm:$0xff] %v821
    // Predicated region
    $region22: #{forward.1} parent=1 // pred_check
      _
    $region23: #{forward.1} parent=1 // pred_check_branch
      %826 = sbr.rel (0) target = $region25
    $region24: #{forward.1} parent=1 // pred_region
      %s828 = ssub.s32 128, 128
      %829 = vsyncadd [#allocation4], %s828
      %s831 = sshll.u32 [#allocation7], 4
      %s832 = int_to_ptr.vmem [resolvable:$true] %s831
      %834 = dma.vmem_to_hbm [thread:$0]  %s832, 128, %s3, [#allocation4]
    $region25: #{forward.1} parent=1 // pred_fallthru
      _
    // Predicated region
    $region26: #{forward.1} parent=1 // pred_check
      _
    $region27: #{forward.1} parent=1 // pred_check_branch
      %836 = sbr.rel (0) target = $region29
    $region28: #{forward.1} parent=1 // pred_region
      %837 = dma.done [#allocation4], 128
    $region29: #{forward.1} parent=1 // pred_fallthru
      _
    %838 = vsyncpa [#allocation3], 1
    %839 = vsyncpa [#allocation6], 1
    %840 = vsyncpa [#allocation4], 1

</llo_original>
